<compile_context>
chip_gen: v7x
topology: tpu7x:2x2x1
jax: 0.10.0
libtpu: 0.0.40
codegen_flags: <defaults>
</compile_context>

<pallas_src>
import functools

import jax
import jax.numpy as jnp
from jax.experimental import pallas as pl
from jax.experimental.pallas import tpu as pltpu


def lstm_tag_kernel(x_ref, wih_ref, whh_ref, b_ref, wtag_ref, btag_ref,
                    out_ref, *, seq_len, batch_tile):
    """One batch tile: x_ref is a time-major (seq_len*batch_tile, input_dim) slab.

    Row t*batch_tile + b of the slab is time step t of local sequence b.
    """
    H = whh_ref.shape[0]
    bt = batch_tile

    # Weights arrive pre-cast to bf16 from the host (native MXU operand dtype).
    wih_bf = wih_ref[...]      # (input_dim, 4H) bf16
    whh_bf = whh_ref[...]      # (H, 4H)         bf16
    wtag_bf = wtag_ref[...]    # (H, T)          bf16
    b = b_ref[...]             # (1, 4H) f32  (= b_ih + b_hh)
    btag = btag_ref[...]       # (1, T)  f32

    # Hoisted input projection for the whole slab (no loop-carried dependence).
    xg = jnp.dot(x_ref[...].astype(jnp.bfloat16), wih_bf,
                 preferred_element_type=jnp.float32) + b     # (seq*Bt, 4H) f32

    # Pre-slice the per-step rows: independent of h, so off the serial chain.
    xg_t = [xg[t * bt:(t + 1) * bt, :] for t in range(seq_len)]

    h = jnp.zeros((bt, H), jnp.float32)
    c = jnp.zeros((bt, H), jnp.float32)
    hs = []

    # Fully-unrolled time recurrence (seq_len is a static Python int).
    for t in range(seq_len):
        gates = xg_t[t] + jnp.dot(h.astype(jnp.bfloat16), whh_bf,
                                  preferred_element_type=jnp.float32)  # (Bt, 4H)

        # Full-lane-width nonlinearities (4H == 128 lanes), then slice per gate.
        sig = jax.nn.sigmoid(gates)     # i, f, o
        th = jnp.tanh(gates)            # g
        i = sig[:, 0 * H:1 * H]
        f = sig[:, 1 * H:2 * H]
        g = th[:, 2 * H:3 * H]
        o = sig[:, 3 * H:4 * H]

        c = f * c + i * g
        h = o * jnp.tanh(c)
        hs.append(h)                    # stays in vregs — no VMEM scratch

    hs2d = jnp.concatenate(hs, axis=0)  # (seq*Bt, H), same row order as xg

    # hidden2tag: (seq*Bt, H) @ (H, T) + b_tag  (bf16 operands, f32 accumulate).
    tag_space = jnp.dot(hs2d.astype(jnp.bfloat16), wtag_bf,
                        preferred_element_type=jnp.float32) + btag      # (seq*Bt, T)

    # log_softmax over the tag dimension (numerically stable).
    m = jnp.max(tag_space, axis=1, keepdims=True)
    shifted = tag_space - m
    lse = jnp.log(jnp.sum(jnp.exp(shifted), axis=1, keepdims=True))
    out_ref[...] = shifted - lse


def lstm_tag_batched(x_seq_major, params, *, batch_tile=8):
    """x_seq_major: (seq_len, B, input_dim) f32 (PyTorch nn.LSTM layout).

    Returns (seq_len, B, tagset_size) f32 log-probs; each batch column is an
    independent sequence and matches LSTMTagPredictor.forward on that column.
    """
    seq_len, B, in_dim = x_seq_major.shape
    H = params["whh_bf16"].shape[0]
    T = params["wtag_bf16"].shape[1]

    batch_tile = min(batch_tile, B)
    if B % batch_tile != 0:
        raise ValueError("B must be divisible by batch_tile")
    nb = B // batch_tile
    rows = seq_len * batch_tile

    # Host-side layout plumbing: (seq, B, in) -> (nb, seq*Bt, in), time-major
    # inside each batch tile, so the kernel only ever sees 2-D slabs.
    x_tiled = (x_seq_major.reshape(seq_len, nb, batch_tile, in_dim)
               .transpose(1, 0, 2, 3)
               .reshape(nb, rows, in_dim))

    def full_block(a):
        # Whole-array block with constant index_map -> stays VMEM-resident
        # across grid steps (no re-DMA per batch tile).
        return pl.BlockSpec(a.shape, lambda j: (0,) * a.ndim)

    flops = 2 * seq_len * B * (in_dim * 4 * H + H * 4 * H + H * T)
    transcendentals = seq_len * B * (2 * 4 * H + H + T + 1)
    bytes_accessed = (x_tiled.size * 4
                      + 2 * (in_dim * 4 * H + H * 4 * H + H * T)   # bf16 weights
                      + 4 * (4 * H + T)                            # f32 biases
                      + seq_len * B * T * 4)                       # output

    kernel = functools.partial(lstm_tag_kernel,
                               seq_len=seq_len, batch_tile=batch_tile)

    out_tiled = pl.pallas_call(
        kernel,
        out_shape=jax.ShapeDtypeStruct((nb, rows, T), jnp.float32),
        grid_spec=pltpu.PrefetchScalarGridSpec(
            num_scalar_prefetch=0,
            grid=(nb,),
            in_specs=[
                pl.BlockSpec((pl.Squeezed(), rows, in_dim),
                             lambda j: (j, 0, 0)),
                full_block(params["wih_bf16"]),
                full_block(params["whh_bf16"]),
                full_block(params["b"]),
                full_block(params["wtag_bf16"]),
                full_block(params["btag"]),
            ],
            out_specs=pl.BlockSpec((pl.Squeezed(), rows, T),
                                   lambda j: (j, 0, 0)),
        ),
        compiler_params=pltpu.CompilerParams(
            dimension_semantics=("parallel",)),
        cost_estimate=pl.CostEstimate(flops=flops,
                                      transcendentals=transcendentals,
                                      bytes_accessed=bytes_accessed),
    )(x_tiled, params["wih_bf16"], params["whh_bf16"], params["b"],
      params["wtag_bf16"], params["btag"])

    # Undo the host-side tiling: (nb, seq*Bt, T) -> (seq, B, T).
    return (out_tiled.reshape(nb, seq_len, batch_tile, T)
            .transpose(1, 0, 2, 3)
            .reshape(seq_len, B, T))


def lstm_tag_predictor(sequence, params):
    """Module-equivalent forward: (seq_len, input_dim) -> (seq_len, tagset_size)."""
    seq_len, in_dim = sequence.shape
    out = lstm_tag_batched(sequence.reshape(seq_len, 1, in_dim), params,
                           batch_tile=1)
    return out[:, 0, :]


def make_params(key, input_dim, hidden_dim, tagset_size):
    """Deterministic synthetic parameters (PyTorch-shaped, then transposed)."""
    ks = jax.random.split(key, 6)
    scale = 1.0 / jnp.sqrt(hidden_dim)
    # PyTorch nn.LSTM param shapes: weight_ih (4H, in), weight_hh (4H, H), biases (4H,)
    w_ih = jax.random.uniform(ks[0], (4 * hidden_dim, input_dim), jnp.float32, -scale, scale)
    w_hh = jax.random.uniform(ks[1], (4 * hidden_dim, hidden_dim), jnp.float32, -scale, scale)
    b_ih = jax.random.uniform(ks[2], (4 * hidden_dim,), jnp.float32, -scale, scale)
    b_hh = jax.random.uniform(ks[3], (4 * hidden_dim,), jnp.float32, -scale, scale)
    # nn.Linear: weight (T, H), bias (T,)
    w_tag = jax.random.uniform(ks[4], (tagset_size, hidden_dim), jnp.float32, -scale, scale)
    b_tag = jax.random.uniform(ks[5], (tagset_size,), jnp.float32, -scale, scale)
    return {
        # Pre-cast bf16 weights for the kernel (half the DMA bytes, MXU-native).
        "wih_bf16": w_ih.T.astype(jnp.bfloat16),     # (in, 4H)
        "whh_bf16": w_hh.T.astype(jnp.bfloat16),     # (H, 4H)
        "wtag_bf16": w_tag.T.astype(jnp.bfloat16),   # (H, T)
        # f32 biases (kernel + reference).
        "b": (b_ih + b_hh).reshape(1, 4 * hidden_dim),     # (1, 4H)
        "btag": b_tag.reshape(1, tagset_size),             # (1, T)
        # f32 weights kept only for the pure-JAX reference.
        "wih_f32": w_ih.T, "whh_f32": w_hh.T, "wtag_f32": w_tag.T,
    }


def reference_forward(sequence, params, matmul_dtype=jnp.float32):
    """Pure-JAX reference of the PyTorch forward pass (batch=1).

    matmul_dtype=jnp.bfloat16 mirrors the kernel's MXU operand dtype exactly
    (f32 accumulation / elementwise) for a tight numerical comparison.
    """
    seq_len = sequence.shape[0]
    H = params["whh_f32"].shape[0]
    wih = params["wih_f32"].astype(matmul_dtype)
    whh = params["whh_f32"].astype(matmul_dtype)
    wtag = params["wtag_f32"].astype(matmul_dtype)

    h = jnp.zeros((1, H), jnp.float32)
    c = jnp.zeros((1, H), jnp.float32)
    hs = []
    for t in range(seq_len):
        x_t = sequence[t:t + 1].astype(matmul_dtype)
        gates = (jnp.dot(x_t, wih, preferred_element_type=jnp.float32)
                 + jnp.dot(h.astype(matmul_dtype), whh,
                           preferred_element_type=jnp.float32)
                 + params["b"])
        i = jax.nn.sigmoid(gates[:, 0 * H:1 * H])
        f = jax.nn.sigmoid(gates[:, 1 * H:2 * H])
        g = jnp.tanh(gates[:, 2 * H:3 * H])
        o = jax.nn.sigmoid(gates[:, 3 * H:4 * H])
        c = f * c + i * g
        h = o * jnp.tanh(c)
        hs.append(h)
    hs = jnp.concatenate(hs, axis=0)
    tag_space = (jnp.dot(hs.astype(matmul_dtype), wtag,
                         preferred_element_type=jnp.float32)
                 + params["btag"])
    return jax.nn.log_softmax(tag_space, axis=1)


if __name__ == "__main__":
    SEQ_LEN, INPUT_DIM, HIDDEN_DIM, TAGSET_SIZE, BATCH = 8, 16, 32, 8, 16

    key = jax.random.PRNGKey(0)
    k_x, k_p, k_b = jax.random.split(key, 3)
    params = make_params(k_p, INPUT_DIM, HIDDEN_DIM, TAGSET_SIZE)

    # ---- Module-equivalent single-sequence forward --------------------------
    sequence = jax.random.normal(k_x, (SEQ_LEN, INPUT_DIM), jnp.float32)
    out = jax.block_until_ready(lstm_tag_predictor(sequence, params))
    assert out.shape == (SEQ_LEN, TAGSET_SIZE)

    # Tight check vs. a reference mirroring the kernel's bf16-operand matmuls.
    ref_bf16 = reference_forward(sequence, params, matmul_dtype=jnp.bfloat16)
    assert jnp.allclose(out, ref_bf16, rtol=1e-3, atol=1e-3), "mismatch vs bf16 reference"
    # Looser semantic check vs. the full-f32 PyTorch-equivalent forward.
    ref_f32 = reference_forward(sequence, params, matmul_dtype=jnp.float32)
    assert jnp.allclose(out, ref_f32, rtol=5e-2, atol=5e-2), "mismatch vs f32 reference"

    # ---- Batched forward: B independent sequences, 2 batch tiles on the grid -
    xb = jax.random.normal(k_b, (SEQ_LEN, BATCH, INPUT_DIM), jnp.float32)
    outb = jax.block_until_ready(lstm_tag_batched(xb, params, batch_tile=8))
    assert outb.shape == (SEQ_LEN, BATCH, TAGSET_SIZE)
    for bcol in range(BATCH):
        refb = reference_forward(xb[:, bcol, :], params, matmul_dtype=jnp.bfloat16)
        assert jnp.allclose(outb[:, bcol, :], refb, rtol=1e-3, atol=1e-3), \
            f"batch column {bcol} mismatch vs bf16 reference"

    print("KERNEL_OK")
</pallas_src>

<mosaic_0001>
module attributes {stable_mosaic.version = 11 : i64} {
  func.func @lstm_tag_kernel(%arg0: i32, %arg1: memref<1x8x16xf32, #tpu.memory_space<vmem>>, %arg2: memref<16x128xbf16, #tpu.memory_space<vmem>>, %arg3: memref<32x128xbf16, #tpu.memory_space<vmem>>, %arg4: memref<1x128xf32, #tpu.memory_space<vmem>>, %arg5: memref<32x8xbf16, #tpu.memory_space<vmem>>, %arg6: memref<1x8xf32, #tpu.memory_space<vmem>>, %arg7: memref<1x8x8xf32, #tpu.memory_space<vmem>>) attributes {dimension_semantics = [#tpu.dimension_semantics<parallel>], iteration_bounds = array<i64: 1>, scalar_prefetch = 0 : i64, scratch_operands = 0 : i64, tpu.core_type = #tpu.core_type<tc>, window_params = [{transform_indices = @transform_0, window_bounds = array<i64: 1, 8, 16>}, {pipeline_mode = #tpu.pipeline_mode<synchronous>, transform_indices = @transform_1, window_bounds = array<i64: 16, 128>}, {pipeline_mode = #tpu.pipeline_mode<synchronous>, transform_indices = @transform_2, window_bounds = array<i64: 32, 128>}, {pipeline_mode = #tpu.pipeline_mode<synchronous>, transform_indices = @transform_3, window_bounds = array<i64: 1, 128>}, {pipeline_mode = #tpu.pipeline_mode<synchronous>, transform_indices = @transform_4, window_bounds = array<i64: 32, 8>}, {pipeline_mode = #tpu.pipeline_mode<synchronous>, transform_indices = @transform_5, window_bounds = array<i64: 1, 8>}, {transform_indices = @transform_6, window_bounds = array<i64: 1, 8, 8>}]} {
    %c0 = arith.constant 0 : index
    %c0_0 = arith.constant 0 : index
    %0 = vector.load %arg2[%c0, %c0_0] : memref<16x128xbf16, #tpu.memory_space<vmem>>, vector<16x128xbf16>
    %c0_1 = arith.constant 0 : index
    %c0_2 = arith.constant 0 : index
    %1 = vector.load %arg3[%c0_1, %c0_2] : memref<32x128xbf16, #tpu.memory_space<vmem>>, vector<32x128xbf16>
    %c0_3 = arith.constant 0 : index
    %c0_4 = arith.constant 0 : index
    %2 = vector.load %arg5[%c0_3, %c0_4] : memref<32x8xbf16, #tpu.memory_space<vmem>>, vector<32x8xbf16>
    %c0_5 = arith.constant 0 : index
    %c0_6 = arith.constant 0 : index
    %3 = vector.load %arg4[%c0_5, %c0_6] : memref<1x128xf32, #tpu.memory_space<vmem>>, vector<1x128xf32>
    %c0_7 = arith.constant 0 : index
    %c0_8 = arith.constant 0 : index
    %4 = vector.load %arg6[%c0_7, %c0_8] : memref<1x8xf32, #tpu.memory_space<vmem>>, vector<1x8xf32>
    %c0_9 = arith.constant 0 : index
    %c0_10 = arith.constant 0 : index
    %c0_11 = arith.constant 0 : index
    %5 = vector.load %arg1[%c0_9, %c0_10, %c0_11] : memref<1x8x16xf32, #tpu.memory_space<vmem>>, vector<1x8x16xf32>
    %6 = vector.shape_cast %5 : vector<1x8x16xf32> to vector<8x16xf32>
    %7 = arith.truncf %6 : vector<8x16xf32> to vector<8x16xbf16>
    %cst = arith.constant dense<0.000000e+00> : vector<8x128xf32>
    %8 = tpu.matmul %7, %0, %cst {dimension_numbers = #tpu.dot_dimension_numbers<[1], [0], [0], [1], [0, 0, 1, 1], [], []>} : vector<8x16xbf16>, vector<16x128xbf16>, vector<8x128xf32> -> vector<8x128xf32>
    %9 = vector.broadcast %3 : vector<1x128xf32> to vector<8x128xf32>
    %10 = arith.addf %8, %9 : vector<8x128xf32>
    %11 = vector.extract_strided_slice %10 {offsets = [0, 0], sizes = [1, 128], strides = [1, 1]} : vector<8x128xf32> to vector<1x128xf32>
    %12 = vector.extract_strided_slice %10 {offsets = [1, 0], sizes = [1, 128], strides = [1, 1]} : vector<8x128xf32> to vector<1x128xf32>
    %13 = vector.extract_strided_slice %10 {offsets = [2, 0], sizes = [1, 128], strides = [1, 1]} : vector<8x128xf32> to vector<1x128xf32>
    %14 = vector.extract_strided_slice %10 {offsets = [3, 0], sizes = [1, 128], strides = [1, 1]} : vector<8x128xf32> to vector<1x128xf32>
    %15 = vector.extract_strided_slice %10 {offsets = [4, 0], sizes = [1, 128], strides = [1, 1]} : vector<8x128xf32> to vector<1x128xf32>
    %16 = vector.extract_strided_slice %10 {offsets = [5, 0], sizes = [1, 128], strides = [1, 1]} : vector<8x128xf32> to vector<1x128xf32>
    %17 = vector.extract_strided_slice %10 {offsets = [6, 0], sizes = [1, 128], strides = [1, 1]} : vector<8x128xf32> to vector<1x128xf32>
    %18 = vector.extract_strided_slice %10 {offsets = [7, 0], sizes = [1, 128], strides = [1, 1]} : vector<8x128xf32> to vector<1x128xf32>
    %cst_12 = arith.constant 0.000000e+00 : f32
    %19 = vector.broadcast %cst_12 : f32 to vector<1x32xf32>
    %cst_13 = arith.constant 0.000000e+00 : f32
    %20 = vector.broadcast %cst_13 : f32 to vector<1x32xf32>
    %21 = arith.truncf %19 : vector<1x32xf32> to vector<1x32xbf16>
    %cst_14 = arith.constant dense<0.000000e+00> : vector<1x128xf32>
    %22 = tpu.matmul %21, %1, %cst_14 {dimension_numbers = #tpu.dot_dimension_numbers<[1], [0], [0], [1], [0, 0, 1, 1], [], []>} : vector<1x32xbf16>, vector<32x128xbf16>, vector<1x128xf32> -> vector<1x128xf32>
    %23 = arith.addf %11, %22 : vector<1x128xf32>
    %24 = arith.negf %23 : vector<1x128xf32>
    %25 = math.exp %24 : vector<1x128xf32>
    %cst_15 = arith.constant 1.000000e+00 : f32
    %26 = vector.broadcast %cst_15 : f32 to vector<1x128xf32>
    %27 = arith.addf %26, %25 : vector<1x128xf32>
    %28 = arith.divf %26, %27 : vector<1x128xf32>
    %29 = math.tanh %23 : vector<1x128xf32>
    %30 = vector.extract_strided_slice %28 {offsets = [0, 0], sizes = [1, 32], strides = [1, 1]} : vector<1x128xf32> to vector<1x32xf32>
    %31 = vector.extract_strided_slice %28 {offsets = [0, 32], sizes = [1, 32], strides = [1, 1]} : vector<1x128xf32> to vector<1x32xf32>
    %32 = vector.extract_strided_slice %29 {offsets = [0, 64], sizes = [1, 32], strides = [1, 1]} : vector<1x128xf32> to vector<1x32xf32>
    %33 = vector.extract_strided_slice %28 {offsets = [0, 96], sizes = [1, 32], strides = [1, 1]} : vector<1x128xf32> to vector<1x32xf32>
    %34 = arith.mulf %31, %20 : vector<1x32xf32>
    %35 = arith.mulf %30, %32 : vector<1x32xf32>
    %36 = arith.addf %34, %35 : vector<1x32xf32>
    %37 = math.tanh %36 : vector<1x32xf32>
    %38 = arith.mulf %33, %37 : vector<1x32xf32>
    %39 = arith.truncf %38 : vector<1x32xf32> to vector<1x32xbf16>
    %cst_16 = arith.constant dense<0.000000e+00> : vector<1x128xf32>
    %40 = tpu.matmul %39, %1, %cst_16 {dimension_numbers = #tpu.dot_dimension_numbers<[1], [0], [0], [1], [0, 0, 1, 1], [], []>} : vector<1x32xbf16>, vector<32x128xbf16>, vector<1x128xf32> -> vector<1x128xf32>
    %41 = arith.addf %12, %40 : vector<1x128xf32>
    %42 = arith.negf %41 : vector<1x128xf32>
    %43 = math.exp %42 : vector<1x128xf32>
    %cst_17 = arith.constant 1.000000e+00 : f32
    %44 = vector.broadcast %cst_17 : f32 to vector<1x128xf32>
    %45 = arith.addf %44, %43 : vector<1x128xf32>
    %46 = arith.divf %44, %45 : vector<1x128xf32>
    %47 = math.tanh %41 : vector<1x128xf32>
    %48 = vector.extract_strided_slice %46 {offsets = [0, 0], sizes = [1, 32], strides = [1, 1]} : vector<1x128xf32> to vector<1x32xf32>
    %49 = vector.extract_strided_slice %46 {offsets = [0, 32], sizes = [1, 32], strides = [1, 1]} : vector<1x128xf32> to vector<1x32xf32>
    %50 = vector.extract_strided_slice %47 {offsets = [0, 64], sizes = [1, 32], strides = [1, 1]} : vector<1x128xf32> to vector<1x32xf32>
    %51 = vector.extract_strided_slice %46 {offsets = [0, 96], sizes = [1, 32], strides = [1, 1]} : vector<1x128xf32> to vector<1x32xf32>
    %52 = arith.mulf %49, %36 : vector<1x32xf32>
    %53 = arith.mulf %48, %50 : vector<1x32xf32>
    %54 = arith.addf %52, %53 : vector<1x32xf32>
    %55 = math.tanh %54 : vector<1x32xf32>
    %56 = arith.mulf %51, %55 : vector<1x32xf32>
    %57 = arith.truncf %56 : vector<1x32xf32> to vector<1x32xbf16>
    %cst_18 = arith.constant dense<0.000000e+00> : vector<1x128xf32>
    %58 = tpu.matmul %57, %1, %cst_18 {dimension_numbers = #tpu.dot_dimension_numbers<[1], [0], [0], [1], [0, 0, 1, 1], [], []>} : vector<1x32xbf16>, vector<32x128xbf16>, vector<1x128xf32> -> vector<1x128xf32>
    %59 = arith.addf %13, %58 : vector<1x128xf32>
    %60 = arith.negf %59 : vector<1x128xf32>
    %61 = math.exp %60 : vector<1x128xf32>
    %cst_19 = arith.constant 1.000000e+00 : f32
    %62 = vector.broadcast %cst_19 : f32 to vector<1x128xf32>
    %63 = arith.addf %62, %61 : vector<1x128xf32>
    %64 = arith.divf %62, %63 : vector<1x128xf32>
    %65 = math.tanh %59 : vector<1x128xf32>
    %66 = vector.extract_strided_slice %64 {offsets = [0, 0], sizes = [1, 32], strides = [1, 1]} : vector<1x128xf32> to vector<1x32xf32>
    %67 = vector.extract_strided_slice %64 {offsets = [0, 32], sizes = [1, 32], strides = [1, 1]} : vector<1x128xf32> to vector<1x32xf32>
    %68 = vector.extract_strided_slice %65 {offsets = [0, 64], sizes = [1, 32], strides = [1, 1]} : vector<1x128xf32> to vector<1x32xf32>
    %69 = vector.extract_strided_slice %64 {offsets = [0, 96], sizes = [1, 32], strides = [1, 1]} : vector<1x128xf32> to vector<1x32xf32>
    %70 = arith.mulf %67, %54 : vector<1x32xf32>
    %71 = arith.mulf %66, %68 : vector<1x32xf32>
    %72 = arith.addf %70, %71 : vector<1x32xf32>
    %73 = math.tanh %72 : vector<1x32xf32>
    %74 = arith.mulf %69, %73 : vector<1x32xf32>
    %75 = arith.truncf %74 : vector<1x32xf32> to vector<1x32xbf16>
    %cst_20 = arith.constant dense<0.000000e+00> : vector<1x128xf32>
    %76 = tpu.matmul %75, %1, %cst_20 {dimension_numbers = #tpu.dot_dimension_numbers<[1], [0], [0], [1], [0, 0, 1, 1], [], []>} : vector<1x32xbf16>, vector<32x128xbf16>, vector<1x128xf32> -> vector<1x128xf32>
    %77 = arith.addf %14, %76 : vector<1x128xf32>
    %78 = arith.negf %77 : vector<1x128xf32>
    %79 = math.exp %78 : vector<1x128xf32>
    %cst_21 = arith.constant 1.000000e+00 : f32
    %80 = vector.broadcast %cst_21 : f32 to vector<1x128xf32>
    %81 = arith.addf %80, %79 : vector<1x128xf32>
    %82 = arith.divf %80, %81 : vector<1x128xf32>
    %83 = math.tanh %77 : vector<1x128xf32>
    %84 = vector.extract_strided_slice %82 {offsets = [0, 0], sizes = [1, 32], strides = [1, 1]} : vector<1x128xf32> to vector<1x32xf32>
    %85 = vector.extract_strided_slice %82 {offsets = [0, 32], sizes = [1, 32], strides = [1, 1]} : vector<1x128xf32> to vector<1x32xf32>
    %86 = vector.extract_strided_slice %83 {offsets = [0, 64], sizes = [1, 32], strides = [1, 1]} : vector<1x128xf32> to vector<1x32xf32>
    %87 = vector.extract_strided_slice %82 {offsets = [0, 96], sizes = [1, 32], strides = [1, 1]} : vector<1x128xf32> to vector<1x32xf32>
    %88 = arith.mulf %85, %72 : vector<1x32xf32>
    %89 = arith.mulf %84, %86 : vector<1x32xf32>
    %90 = arith.addf %88, %89 : vector<1x32xf32>
    %91 = math.tanh %90 : vector<1x32xf32>
    %92 = arith.mulf %87, %91 : vector<1x32xf32>
    %93 = arith.truncf %92 : vector<1x32xf32> to vector<1x32xbf16>
    %cst_22 = arith.constant dense<0.000000e+00> : vector<1x128xf32>
    %94 = tpu.matmul %93, %1, %cst_22 {dimension_numbers = #tpu.dot_dimension_numbers<[1], [0], [0], [1], [0, 0, 1, 1], [], []>} : vector<1x32xbf16>, vector<32x128xbf16>, vector<1x128xf32> -> vector<1x128xf32>
    %95 = arith.addf %15, %94 : vector<1x128xf32>
    %96 = arith.negf %95 : vector<1x128xf32>
    %97 = math.exp %96 : vector<1x128xf32>
    %cst_23 = arith.constant 1.000000e+00 : f32
    %98 = vector.broadcast %cst_23 : f32 to vector<1x128xf32>
    %99 = arith.addf %98, %97 : vector<1x128xf32>
    %100 = arith.divf %98, %99 : vector<1x128xf32>
    %101 = math.tanh %95 : vector<1x128xf32>
    %102 = vector.extract_strided_slice %100 {offsets = [0, 0], sizes = [1, 32], strides = [1, 1]} : vector<1x128xf32> to vector<1x32xf32>
    %103 = vector.extract_strided_slice %100 {offsets = [0, 32], sizes = [1, 32], strides = [1, 1]} : vector<1x128xf32> to vector<1x32xf32>
    %104 = vector.extract_strided_slice %101 {offsets = [0, 64], sizes = [1, 32], strides = [1, 1]} : vector<1x128xf32> to vector<1x32xf32>
    %105 = vector.extract_strided_slice %100 {offsets = [0, 96], sizes = [1, 32], strides = [1, 1]} : vector<1x128xf32> to vector<1x32xf32>
    %106 = arith.mulf %103, %90 : vector<1x32xf32>
    %107 = arith.mulf %102, %104 : vector<1x32xf32>
    %108 = arith.addf %106, %107 : vector<1x32xf32>
    %109 = math.tanh %108 : vector<1x32xf32>
    %110 = arith.mulf %105, %109 : vector<1x32xf32>
    %111 = arith.truncf %110 : vector<1x32xf32> to vector<1x32xbf16>
    %cst_24 = arith.constant dense<0.000000e+00> : vector<1x128xf32>
    %112 = tpu.matmul %111, %1, %cst_24 {dimension_numbers = #tpu.dot_dimension_numbers<[1], [0], [0], [1], [0, 0, 1, 1], [], []>} : vector<1x32xbf16>, vector<32x128xbf16>, vector<1x128xf32> -> vector<1x128xf32>
    %113 = arith.addf %16, %112 : vector<1x128xf32>
    %114 = arith.negf %113 : vector<1x128xf32>
    %115 = math.exp %114 : vector<1x128xf32>
    %cst_25 = arith.constant 1.000000e+00 : f32
    %116 = vector.broadcast %cst_25 : f32 to vector<1x128xf32>
    %117 = arith.addf %116, %115 : vector<1x128xf32>
    %118 = arith.divf %116, %117 : vector<1x128xf32>
    %119 = math.tanh %113 : vector<1x128xf32>
    %120 = vector.extract_strided_slice %118 {offsets = [0, 0], sizes = [1, 32], strides = [1, 1]} : vector<1x128xf32> to vector<1x32xf32>
    %121 = vector.extract_strided_slice %118 {offsets = [0, 32], sizes = [1, 32], strides = [1, 1]} : vector<1x128xf32> to vector<1x32xf32>
    %122 = vector.extract_strided_slice %119 {offsets = [0, 64], sizes = [1, 32], strides = [1, 1]} : vector<1x128xf32> to vector<1x32xf32>
    %123 = vector.extract_strided_slice %118 {offsets = [0, 96], sizes = [1, 32], strides = [1, 1]} : vector<1x128xf32> to vector<1x32xf32>
    %124 = arith.mulf %121, %108 : vector<1x32xf32>
    %125 = arith.mulf %120, %122 : vector<1x32xf32>
    %126 = arith.addf %124, %125 : vector<1x32xf32>
    %127 = math.tanh %126 : vector<1x32xf32>
    %128 = arith.mulf %123, %127 : vector<1x32xf32>
    %129 = arith.truncf %128 : vector<1x32xf32> to vector<1x32xbf16>
    %cst_26 = arith.constant dense<0.000000e+00> : vector<1x128xf32>
    %130 = tpu.matmul %129, %1, %cst_26 {dimension_numbers = #tpu.dot_dimension_numbers<[1], [0], [0], [1], [0, 0, 1, 1], [], []>} : vector<1x32xbf16>, vector<32x128xbf16>, vector<1x128xf32> -> vector<1x128xf32>
    %131 = arith.addf %17, %130 : vector<1x128xf32>
    %132 = arith.negf %131 : vector<1x128xf32>
    %133 = math.exp %132 : vector<1x128xf32>
    %cst_27 = arith.constant 1.000000e+00 : f32
    %134 = vector.broadcast %cst_27 : f32 to vector<1x128xf32>
    %135 = arith.addf %134, %133 : vector<1x128xf32>
    %136 = arith.divf %134, %135 : vector<1x128xf32>
    %137 = math.tanh %131 : vector<1x128xf32>
    %138 = vector.extract_strided_slice %136 {offsets = [0, 0], sizes = [1, 32], strides = [1, 1]} : vector<1x128xf32> to vector<1x32xf32>
    %139 = vector.extract_strided_slice %136 {offsets = [0, 32], sizes = [1, 32], strides = [1, 1]} : vector<1x128xf32> to vector<1x32xf32>
    %140 = vector.extract_strided_slice %137 {offsets = [0, 64], sizes = [1, 32], strides = [1, 1]} : vector<1x128xf32> to vector<1x32xf32>
    %141 = vector.extract_strided_slice %136 {offsets = [0, 96], sizes = [1, 32], strides = [1, 1]} : vector<1x128xf32> to vector<1x32xf32>
    %142 = arith.mulf %139, %126 : vector<1x32xf32>
    %143 = arith.mulf %138, %140 : vector<1x32xf32>
    %144 = arith.addf %142, %143 : vector<1x32xf32>
    %145 = math.tanh %144 : vector<1x32xf32>
    %146 = arith.mulf %141, %145 : vector<1x32xf32>
    %147 = arith.truncf %146 : vector<1x32xf32> to vector<1x32xbf16>
    %cst_28 = arith.constant dense<0.000000e+00> : vector<1x128xf32>
    %148 = tpu.matmul %147, %1, %cst_28 {dimension_numbers = #tpu.dot_dimension_numbers<[1], [0], [0], [1], [0, 0, 1, 1], [], []>} : vector<1x32xbf16>, vector<32x128xbf16>, vector<1x128xf32> -> vector<1x128xf32>
    %149 = arith.addf %18, %148 : vector<1x128xf32>
    %150 = arith.negf %149 : vector<1x128xf32>
    %151 = math.exp %150 : vector<1x128xf32>
    %cst_29 = arith.constant 1.000000e+00 : f32
    %152 = vector.broadcast %cst_29 : f32 to vector<1x128xf32>
    %153 = arith.addf %152, %151 : vector<1x128xf32>
    %154 = arith.divf %152, %153 : vector<1x128xf32>
    %155 = math.tanh %149 : vector<1x128xf32>
    %156 = vector.extract_strided_slice %154 {offsets = [0, 0], sizes = [1, 32], strides = [1, 1]} : vector<1x128xf32> to vector<1x32xf32>
    %157 = vector.extract_strided_slice %154 {offsets = [0, 32], sizes = [1, 32], strides = [1, 1]} : vector<1x128xf32> to vector<1x32xf32>
    %158 = vector.extract_strided_slice %155 {offsets = [0, 64], sizes = [1, 32], strides = [1, 1]} : vector<1x128xf32> to vector<1x32xf32>
    %159 = vector.extract_strided_slice %154 {offsets = [0, 96], sizes = [1, 32], strides = [1, 1]} : vector<1x128xf32> to vector<1x32xf32>
    %160 = arith.mulf %157, %144 : vector<1x32xf32>
    %161 = arith.mulf %156, %158 : vector<1x32xf32>
    %162 = arith.addf %160, %161 : vector<1x32xf32>
    %163 = math.tanh %162 : vector<1x32xf32>
    %164 = arith.mulf %159, %163 : vector<1x32xf32>
    %165 = tpu.concatenate %38, %56, %74, %92, %110, %128, %146, %164 in 0 : vector<1x32xf32>, vector<1x32xf32>, vector<1x32xf32>, vector<1x32xf32>, vector<1x32xf32>, vector<1x32xf32>, vector<1x32xf32>, vector<1x32xf32> -> vector<8x32xf32>
    %166 = arith.truncf %165 : vector<8x32xf32> to vector<8x32xbf16>
    %cst_30 = arith.constant dense<0.000000e+00> : vector<8x8xf32>
    %167 = tpu.matmul %166, %2, %cst_30 {dimension_numbers = #tpu.dot_dimension_numbers<[1], [0], [0], [1], [0, 0, 1, 1], [], []>} : vector<8x32xbf16>, vector<32x8xbf16>, vector<8x8xf32> -> vector<8x8xf32>
    %168 = vector.broadcast %4 : vector<1x8xf32> to vector<8x8xf32>
    %169 = arith.addf %167, %168 : vector<8x8xf32>
    %cst_31 = arith.constant dense<0xFF800000> : vector<8xf32>
    %170 = vector.multi_reduction <maximumf>, %169, %cst_31 [1] : vector<8x8xf32> to vector<8xf32>
    %171 = vector.shape_cast %170 : vector<8xf32> to vector<8x1xf32>
    %172 = vector.broadcast %171 : vector<8x1xf32> to vector<8x8xf32>
    %173 = arith.subf %169, %172 : vector<8x8xf32>
    %174 = math.exp %173 : vector<8x8xf32>
    %cst_32 = arith.constant dense<0.000000e+00> : vector<8xf32>
    %175 = vector.multi_reduction <add>, %174, %cst_32 [1] : vector<8x8xf32> to vector<8xf32>
    %176 = vector.shape_cast %175 : vector<8xf32> to vector<8x1xf32>
    %177 = math.log %176 : vector<8x1xf32>
    %178 = vector.broadcast %177 : vector<8x1xf32> to vector<8x8xf32>
    %179 = arith.subf %173, %178 : vector<8x8xf32>
    %c0_33 = arith.constant 0 : index
    %c0_34 = arith.constant 0 : index
    %c0_35 = arith.constant 0 : index
    %180 = vector.load %arg7[%c0_33, %c0_34, %c0_35] : memref<1x8x8xf32, #tpu.memory_space<vmem>>, vector<1x8x8xf32>
    %181 = vector.shape_cast %180 : vector<1x8x8xf32> to vector<8x8xf32>
    %182 = vector.shape_cast %179 : vector<8x8xf32> to vector<1x8x8xf32>
    tpu.vector_store %arg7[%c0_33, %c0_34, %c0_35], %182 {strides = array<i32>} : memref<1x8x8xf32, #tpu.memory_space<vmem>>, vector<1x8x8xf32>,
    return
  }
  func.func @transform_0(%arg0: i32) -> (i32, i32, i32) {
    %c0_i32 = arith.constant 0 : i32
    %c0_i32_0 = arith.constant 0 : i32
    %c0_i32_1 = arith.constant 0 : i32
    return %arg0, %c0_i32, %c0_i32_0 : i32, i32, i32
  }
  func.func @transform_1(%arg0: i32) -> (i32, i32) {
    %c0_i32 = arith.constant 0 : i32
    %c0_i32_0 = arith.constant 0 : i32
    %c0_i32_1 = arith.constant 0 : i32
    return %c0_i32, %c0_i32_0 : i32, i32
  }
  func.func @transform_2(%arg0: i32) -> (i32, i32) {
    %c0_i32 = arith.constant 0 : i32
    %c0_i32_0 = arith.constant 0 : i32
    %c0_i32_1 = arith.constant 0 : i32
    return %c0_i32, %c0_i32_0 : i32, i32
  }
  func.func @transform_3(%arg0: i32) -> (i32, i32) {
    %c0_i32 = arith.constant 0 : i32
    %c0_i32_0 = arith.constant 0 : i32
    %c0_i32_1 = arith.constant 0 : i32
    return %c0_i32, %c0_i32_0 : i32, i32
  }
  func.func @transform_4(%arg0: i32) -> (i32, i32) {
    %c0_i32 = arith.constant 0 : i32
    %c0_i32_0 = arith.constant 0 : i32
    %c0_i32_1 = arith.constant 0 : i32
    return %c0_i32, %c0_i32_0 : i32, i32
  }
  func.func @transform_5(%arg0: i32) -> (i32, i32) {
    %c0_i32 = arith.constant 0 : i32
    %c0_i32_0 = arith.constant 0 : i32
    %c0_i32_1 = arith.constant 0 : i32
    return %c0_i32, %c0_i32_0 : i32, i32
  }
  func.func @transform_6(%arg0: i32) -> (i32, i32, i32) {
    %c0_i32 = arith.constant 0 : i32
    %c0_i32_0 = arith.constant 0 : i32
    %c0_i32_1 = arith.constant 0 : i32
    return %arg0, %c0_i32, %c0_i32_0 : i32, i32, i32
  }
}

</mosaic_0001>

<llo_original>
// kernel: tpu_custom_call.1
$region0: #{tpu_custom_call.1}
  #allocation0 [shape = 'u32[]', space=smem, size = 0x4, offset = 0x4, fixed_abs, tag = 'smem constant byte address 0x4 - core index']
  #allocation1 [shape = 'u32[144,128]{1,0:T(1,128)}', space=vmem, size = 0x12000, scoped, tag = 'internal scratch']
  %s0 = inlined_call_operand.vmem [shape: f32[1,8,16], index: 0, kind: input, shape index: {}]
  %s1 = inlined_call_operand.hbm [shape: bf16[16,128], index: 1, kind: input, shape index: {}]
  %s2 = inlined_call_operand.vmem [shape: bf16[32,128], index: 2, kind: input, shape index: {}]
  %s3 = inlined_call_operand.vmem [shape: f32[1,128], index: 3, kind: input, shape index: {}]
  %s4 = inlined_call_operand.vmem [shape: bf16[32,8], index: 4, kind: input, shape index: {}]
  %s5 = inlined_call_operand.vmem [shape: f32[1,8], index: 5, kind: input, shape index: {}]
  %s6 = inlined_call_operand.hbm [shape: f32[1,8,8], index: 6, kind: output, shape index: {}]
  %s7 = sld [smem:[#allocation0]]
  $region38: #{tpu_custom_call.1} parent=0
    _
  %s9 = ssub.s32 1, %s7
  %s10 = scalar_select 0, %s9, %s7
  $region1: #{tpu_custom_call.1} parent=0
    #allocation2 [shape = 'u8[4096]{0}', space=vmem, size = 0x1000, scoped, tag = 'input window, operand 1, single buffered']
    #allocation3 [shape = 's32[1]{0}', space=sflag, size = 0x4, scoped, tag = 'scoped memory for tpu_custom_call.1']
    #allocation4 [shape = 's32[1]{0}', space=sflag, size = 0x4, scoped, tag = 'scoped memory for tpu_custom_call.1']
    #allocation5 [shape = 'u8[4096]{0}', space=vmem, size = 0x1000, scoped, tag = 'output window, operand 0, single buffered']
    %11 = vsyncpa [#allocation3], 0
    %12 = vsyncpa [#allocation4], 0
    // Predicated region
    $region2: #{tpu_custom_call.1} parent=1 // pred_check
      _
    $region3: #{tpu_custom_call.1} parent=1 // pred_check_branch
      %14 = sbr.rel (0) target = $region5
    $region4: #{tpu_custom_call.1} parent=1 // pred_region
      _
    $region5: #{tpu_custom_call.1} parent=1 // pred_fallthru
      _
    // Predicated region
    $region6: #{tpu_custom_call.1} parent=1 // pred_check
      _
    $region7: #{tpu_custom_call.1} parent=1 // pred_check_branch
      %16 = sbr.rel (0) target = $region9
    $region8: #{tpu_custom_call.1} parent=1 // pred_region
      %s18 = ssub.s32 128, 128
      %19 = vsyncadd [#allocation3], %s18
      %s20 = sshll.u32 [#allocation2], 4
      %s21 = int_to_ptr.vmem [resolvable:$true] %s20
      %26 = dma.hbm_to_vmem [thread:$0]  %s1, 128, %s21, [#allocation3], 64, 64, 4
    $region9: #{tpu_custom_call.1} parent=1 // pred_fallthru
      _
    // Predicated region
    $region10: #{tpu_custom_call.1} parent=1 // pred_check
      _
    $region11: #{tpu_custom_call.1} parent=1 // pred_check_branch
      %28 = sbr.rel (0) target = $region13
    $region12: #{tpu_custom_call.1} parent=1 // pred_region
      _
    $region13: #{tpu_custom_call.1} parent=1 // pred_fallthru
      _
    // Predicated region
    $region14: #{tpu_custom_call.1} parent=1 // pred_check
      _
    $region15: #{tpu_custom_call.1} parent=1 // pred_check_branch
      %30 = sbr.rel (0) target = $region17
    $region16: #{tpu_custom_call.1} parent=1 // pred_region
      _
    $region17: #{tpu_custom_call.1} parent=1 // pred_fallthru
      _
    // Predicated region
    $region18: #{tpu_custom_call.1} parent=1 // pred_check
      _
    $region19: #{tpu_custom_call.1} parent=1 // pred_check_branch
      %32 = sbr.rel (0) target = $region21
    $region20: #{tpu_custom_call.1} parent=1 // pred_region
      _
    $region21: #{tpu_custom_call.1} parent=1 // pred_fallthru
      _
    // Predicated region
    $region22: #{tpu_custom_call.1} parent=1 // pred_check
      _
    $region23: #{tpu_custom_call.1} parent=1 // pred_check_branch
      %34 = sbr.rel (0) target = $region25
    $region24: #{tpu_custom_call.1} parent=1 // pred_region
      _
    $region25: #{tpu_custom_call.1} parent=1 // pred_fallthru
      _
    // Predicated region
    $region26: #{tpu_custom_call.1} parent=1 // pred_check
      _
    $region27: #{tpu_custom_call.1} parent=1 // pred_check_branch
      %36 = sbr.rel (0) target = $region29
    $region28: #{tpu_custom_call.1} parent=1 // pred_region
      %37 = dma.done [#allocation3], 128
    $region29: #{tpu_custom_call.1} parent=1 // pred_fallthru
      _
    %v39 = vld [vmem:[#allocation2] sm:$0xf]
    %v40 = vld [vmem:[#allocation2 + $0x4] sm:$0xf]
    %v41 = vld [vmem:[%s2] sm:$0xf]
    %v42 = vld [vmem:[%s2 + $0x4] sm:$0xf]
    %v43 = vld [vmem:[%s2 + $0x8] sm:$0xf]
    %v44 = vld [vmem:[%s2 + $0xc] sm:$0xf]
    %v45 = vld [vmem:[%s4] sm:$0xf]
    %v46 = vld [vmem:[%s4 + $0x4] sm:$0xf]
    %v47 = vld [vmem:[%s4 + $0x8] sm:$0xf]
    %v48 = vld [vmem:[%s4 + $0xc] sm:$0xf]
    %v49 = vld [vmem:[%s3] sm:$0x1]
    %v50 = vld [vmem:[%s5] sm:$0x1]
    %v51 = vld [vmem:[%s0] sm:$0xff]
    %v52 = vpack.c.bf16 %v51, %v51
    %v54 = vlaneseq
    %v55 = vshrl.u32 %v54, 7
    %v56 = vsub.s32 0, %v55
    %v57 = vrot.slane %v49, %v56
    %v61 = vunpack.c.l.b16 %v39
    %v62 = vunpack.c.l.b16 %v40
    %v63 = vpack.c.b16 %v62, %v61
    %vm65 = vcmask 130048
    %v67 = vsel %vm65, %v52, 0
    %69 = vmatprep.subr.bf16.mxu0 0
    %70 = vmatpush1.bf16.msra.mxu0 %v63
    %71 = vmatprep.subr.bf16.mxu0 0
    %72 = vmatpush1.bf16.msra.mxu0 0
    %73 = vmatprep.subr.bf16.mxu0 0
    %74 = vmatpush1.bf16.msra.mxu0 0
    %75 = vmatprep.subr.bf16.mxu0 0
    %76 = vmatpush1.bf16.msra.mxu0 0
    %77 = vmatprep.subr.bf16.mxu0 0
    %78 = vmatpush1.bf16.msra.mxu0 0
    %79 = vmatprep.subr.bf16.mxu0 0
    %80 = vmatpush1.bf16.msra.mxu0 0
    %81 = vmatprep.subr.bf16.mxu0 0
    %82 = vmatpush1.bf16.msra.mxu0 0
    %83 = vmatprep.subr.bf16.mxu0 0
    %84 = vmatpush1.bf16.msra.mxu0 0
    %85 = vmatprep.subr.bf16.mxu0 0
    %86 = vmatpush1.bf16.msra.mxu0 0
    %87 = vmatprep.subr.bf16.mxu0 0
    %88 = vmatpush1.bf16.msra.mxu0 0
    %89 = vmatprep.subr.bf16.mxu0 0
    %90 = vmatpush1.bf16.msra.mxu0 0
    %91 = vmatprep.subr.bf16.mxu0 0
    %92 = vmatpush1.bf16.msra.mxu0 0
    %93 = vmatprep.subr.bf16.mxu0 0
    %94 = vmatpush1.bf16.msra.mxu0 0
    %95 = vmatprep.subr.bf16.mxu0 0
    %96 = vmatpush1.bf16.msra.mxu0 0
    %97 = vmatprep.subr.bf16.mxu0 0
    %98 = vmatpush1.bf16.msra.mxu0 0
    %99 = vmatprep.subr.bf16.mxu0 0
    %100 = vmatpush1.bf16.msra.mxu0 0
    %101 = vmatprep.mubr.bf16.mxu0 0
    %102 = vmatmul.mubr.bf16.gmra.mrb[0].mxu0 %v67
    %v103 = vpop.f32.mrb[0].mxu0
    %v104 = vadd.f32 %v57, %v103
    %v105 = vpop.f32.mrb[0].mxu0
    %v106 = vpop.f32.mrb[0].mxu0
    %v107 = vpop.f32.mrb[0].mxu0
    %108 = vdwg.mxu0
    %v113 = vunpack.c.l.b16 %v41
    %v114 = vunpack.c.l.b16 %v42
    %v115 = vunpack.c.l.b16 %v43
    %v116 = vunpack.c.l.b16 %v44
    %v117 = vpack.c.b16 %v114, %v113
    %v118 = vpack.c.b16 %v116, %v115
    %vm121 = vcmask 261120
    %v123 = vsel %vm121, 0, 0
    %125 = vmatprep.subr.bf16.mxu0 0
    %126 = vmatpush1.bf16.msra.mxu0 %v117
    %127 = vmatprep.subr.bf16.mxu0 0
    %128 = vmatpush1.bf16.msra.mxu0 %v118
    %129 = vmatprep.subr.bf16.mxu0 0
    %130 = vmatpush1.bf16.msra.mxu0 0
    %131 = vmatprep.subr.bf16.mxu0 0
    %132 = vmatpush1.bf16.msra.mxu0 0
    %133 = vmatprep.subr.bf16.mxu0 0
    %134 = vmatpush1.bf16.msra.mxu0 0
    %135 = vmatprep.subr.bf16.mxu0 0
    %136 = vmatpush1.bf16.msra.mxu0 0
    %137 = vmatprep.subr.bf16.mxu0 0
    %138 = vmatpush1.bf16.msra.mxu0 0
    %139 = vmatprep.subr.bf16.mxu0 0
    %140 = vmatpush1.bf16.msra.mxu0 0
    %141 = vmatprep.subr.bf16.mxu0 0
    %142 = vmatpush1.bf16.msra.mxu0 0
    %143 = vmatprep.subr.bf16.mxu0 0
    %144 = vmatpush1.bf16.msra.mxu0 0
    %145 = vmatprep.subr.bf16.mxu0 0
    %146 = vmatpush1.bf16.msra.mxu0 0
    %147 = vmatprep.subr.bf16.mxu0 0
    %148 = vmatpush1.bf16.msra.mxu0 0
    %149 = vmatprep.subr.bf16.mxu0 0
    %150 = vmatpush1.bf16.msra.mxu0 0
    %151 = vmatprep.subr.bf16.mxu0 0
    %152 = vmatpush1.bf16.msra.mxu0 0
    %153 = vmatprep.subr.bf16.mxu0 0
    %154 = vmatpush1.bf16.msra.mxu0 0
    %155 = vmatprep.subr.bf16.mxu0 0
    %156 = vmatpush1.bf16.msra.mxu0 0
    %157 = vmatprep.mubr.bf16.mxu0 0
    %158 = vmatmul.mubr.bf16.gmra.mrb[0].mxu0 %v123
    %v159 = vpop.f32.mrb[0].mxu0
    %v160 = vadd.f32 0.0, %v159
    %v161 = vpop.f32.mrb[0].mxu0
    %v162 = vpop.f32.mrb[0].mxu0
    %v163 = vpop.f32.mrb[0].mxu0
    %164 = vdwg.mxu0
    %v165 = vadd.f32 %v104, %v160
    %v166 = vxor.u32 %v165, 2147483648
    %v167 = vmul.f32 %v166, 1.442695
    %v168 = vpow.pop %v167
    %v169 = vadd.f32 %v168, 1.0
    %v170 = vrcp.pop %v169
    %v171 = vmul.f32 1.0, %v170
    %v172 = vtanh.pop %v165
    %v173 = vmul.f32 %v171, 0.0
    %175 = vrot.lane.b32.xlu0 %v172, 64
    %v176 = vpop.permute.xlu0 %175
    %v178 = vmul.f32 %v171, %v176
    %180 = vrot.lane.b32.xlu0 %v178, 32
    %v181 = vpop.permute.xlu0 %180
    %v183 = vadd.f32 %v173, %v181
    %v184 = vtanh.pop %v183
    %186 = vrot.lane.b32.xlu0 %v184, 64
    %v187 = vpop.permute.xlu0 %186
    %v189 = vmul.f32 %v171, %v187
    %v190 = vpack.c.bf16 %v189, %v189
    %192 = vrot.lane.b32.xlu0 %v190, 32
    %v193 = vpop.permute.xlu0 %192
    %v195 = vsel %vm121, %v193, 0
    %197 = vmatprep.subr.bf16.mxu0 0
    %198 = vmatpush1.bf16.msra.mxu0 %v117
    %199 = vmatprep.subr.bf16.mxu0 0
    %200 = vmatpush1.bf16.msra.mxu0 %v118
    %201 = vmatprep.subr.bf16.mxu0 0
    %202 = vmatpush1.bf16.msra.mxu0 0
    %203 = vmatprep.subr.bf16.mxu0 0
    %204 = vmatpush1.bf16.msra.mxu0 0
    %205 = vmatprep.subr.bf16.mxu0 0
    %206 = vmatpush1.bf16.msra.mxu0 0
    %207 = vmatprep.subr.bf16.mxu0 0
    %208 = vmatpush1.bf16.msra.mxu0 0
    %209 = vmatprep.subr.bf16.mxu0 0
    %210 = vmatpush1.bf16.msra.mxu0 0
    %211 = vmatprep.subr.bf16.mxu0 0
    %212 = vmatpush1.bf16.msra.mxu0 0
    %213 = vmatprep.subr.bf16.mxu0 0
    %214 = vmatpush1.bf16.msra.mxu0 0
    %215 = vmatprep.subr.bf16.mxu0 0
    %216 = vmatpush1.bf16.msra.mxu0 0
    %217 = vmatprep.subr.bf16.mxu0 0
    %218 = vmatpush1.bf16.msra.mxu0 0
    %219 = vmatprep.subr.bf16.mxu0 0
    %220 = vmatpush1.bf16.msra.mxu0 0
    %221 = vmatprep.subr.bf16.mxu0 0
    %222 = vmatpush1.bf16.msra.mxu0 0
    %223 = vmatprep.subr.bf16.mxu0 0
    %224 = vmatpush1.bf16.msra.mxu0 0
    %225 = vmatprep.subr.bf16.mxu0 0
    %226 = vmatpush1.bf16.msra.mxu0 0
    %227 = vmatprep.subr.bf16.mxu0 0
    %228 = vmatpush1.bf16.msra.mxu0 0
    %229 = vmatprep.mubr.bf16.mxu0 0
    %230 = vmatmul.mubr.bf16.gmra.mrb[0].mxu0 %v195
    %v231 = vpop.f32.mrb[0].mxu0
    %v232 = vadd.f32 0.0, %v231
    %v233 = vpop.f32.mrb[0].mxu0
    %v234 = vpop.f32.mrb[0].mxu0
    %v235 = vpop.f32.mrb[0].mxu0
    %236 = vdwg.mxu0
    %v238 = vrot.slane %v232, 7
    %v240 = vadd.f32 %v104, %v238
    %v241 = vxor.u32 %v240, 2147483648
    %v242 = vmul.f32 %v241, 1.442695
    %v243 = vpow.pop %v242
    %v244 = vadd.f32 %v243, 1.0
    %v245 = vrcp.pop %v244
    %v246 = vmul.f32 1.0, %v245
    %v247 = vtanh.pop %v240
    %v249 = vrot.slane %v183, 7
    %v251 = vmul.f32 %v246, %v249
    %253 = vrot.lane.b32.xlu0 %v247, 64
    %v254 = vpop.permute.xlu0 %253
    %v256 = vmul.f32 %v246, %v254
    %258 = vrot.lane.b32.xlu0 %v256, 32
    %v259 = vpop.permute.xlu0 %258
    %v261 = vadd.f32 %v251, %v259
    %v262 = vtanh.pop %v261
    %264 = vrot.lane.b32.xlu0 %v262, 64
    %v265 = vpop.permute.xlu0 %264
    %v267 = vmul.f32 %v246, %v265
    %v268 = vpack.c.bf16 %v267, %v267
    %v270 = vshrl.u32 %v268, 16
    %272 = vrot.lane.b32.xlu0 %v270, 32
    %v273 = vpop.permute.xlu0 %272
    %v275 = vsel %vm121, %v273, 0
    %277 = vmatprep.subr.bf16.mxu0 0
    %278 = vmatpush1.bf16.msra.mxu0 %v117
    %279 = vmatprep.subr.bf16.mxu0 0
    %280 = vmatpush1.bf16.msra.mxu0 %v118
    %281 = vmatprep.subr.bf16.mxu0 0
    %282 = vmatpush1.bf16.msra.mxu0 0
    %283 = vmatprep.subr.bf16.mxu0 0
    %284 = vmatpush1.bf16.msra.mxu0 0
    %285 = vmatprep.subr.bf16.mxu0 0
    %286 = vmatpush1.bf16.msra.mxu0 0
    %287 = vmatprep.subr.bf16.mxu0 0
    %288 = vmatpush1.bf16.msra.mxu0 0
    %289 = vmatprep.subr.bf16.mxu0 0
    %290 = vmatpush1.bf16.msra.mxu0 0
    %291 = vmatprep.subr.bf16.mxu0 0
    %292 = vmatpush1.bf16.msra.mxu0 0
    %293 = vmatprep.subr.bf16.mxu0 0
    %294 = vmatpush1.bf16.msra.mxu0 0
    %295 = vmatprep.subr.bf16.mxu0 0
    %296 = vmatpush1.bf16.msra.mxu0 0
    %297 = vmatprep.subr.bf16.mxu0 0
    %298 = vmatpush1.bf16.msra.mxu0 0
    %299 = vmatprep.subr.bf16.mxu0 0
    %300 = vmatpush1.bf16.msra.mxu0 0
    %301 = vmatprep.subr.bf16.mxu0 0
    %302 = vmatpush1.bf16.msra.mxu0 0
    %303 = vmatprep.subr.bf16.mxu0 0
    %304 = vmatpush1.bf16.msra.mxu0 0
    %305 = vmatprep.subr.bf16.mxu0 0
    %306 = vmatpush1.bf16.msra.mxu0 0
    %307 = vmatprep.subr.bf16.mxu0 0
    %308 = vmatpush1.bf16.msra.mxu0 0
    %309 = vmatprep.mubr.bf16.mxu0 0
    %310 = vmatmul.mubr.bf16.gmra.mrb[0].mxu0 %v275
    %v311 = vpop.f32.mrb[0].mxu0
    %v312 = vadd.f32 0.0, %v311
    %v313 = vpop.f32.mrb[0].mxu0
    %v314 = vpop.f32.mrb[0].mxu0
    %v315 = vpop.f32.mrb[0].mxu0
    %316 = vdwg.mxu0
    %v318 = vrot.slane %v312, 6
    %v320 = vadd.f32 %v104, %v318
    %v321 = vxor.u32 %v320, 2147483648
    %v322 = vmul.f32 %v321, 1.442695
    %v323 = vpow.pop %v322
    %v324 = vadd.f32 %v323, 1.0
    %v325 = vrcp.pop %v324
    %v326 = vmul.f32 1.0, %v325
    %v327 = vtanh.pop %v320
    %v329 = vrot.slane %v261, 7
    %v331 = vmul.f32 %v326, %v329
    %333 = vrot.lane.b32.xlu0 %v327, 64
    %v334 = vpop.permute.xlu0 %333
    %v336 = vmul.f32 %v326, %v334
    %338 = vrot.lane.b32.xlu0 %v336, 32
    %v339 = vpop.permute.xlu0 %338
    %v341 = vadd.f32 %v331, %v339
    %v342 = vtanh.pop %v341
    %344 = vrot.lane.b32.xlu0 %v342, 64
    %v345 = vpop.permute.xlu0 %344
    %v347 = vmul.f32 %v326, %v345
    %v348 = vpack.c.bf16 %v347, %v347
    %v350 = vrot.slane %v348, 1
    %351 = vrot.lane.b32.xlu0 %v350, 32
    %v352 = vpop.permute.xlu0 %351
    %v354 = vsel %vm121, %v352, 0
    %356 = vmatprep.subr.bf16.mxu0 0
    %357 = vmatpush1.bf16.msra.mxu0 %v117
    %358 = vmatprep.subr.bf16.mxu0 0
    %359 = vmatpush1.bf16.msra.mxu0 %v118
    %360 = vmatprep.subr.bf16.mxu0 0
    %361 = vmatpush1.bf16.msra.mxu0 0
    %362 = vmatprep.subr.bf16.mxu0 0
    %363 = vmatpush1.bf16.msra.mxu0 0
    %364 = vmatprep.subr.bf16.mxu0 0
    %365 = vmatpush1.bf16.msra.mxu0 0
    %366 = vmatprep.subr.bf16.mxu0 0
    %367 = vmatpush1.bf16.msra.mxu0 0
    %368 = vmatprep.subr.bf16.mxu0 0
    %369 = vmatpush1.bf16.msra.mxu0 0
    %370 = vmatprep.subr.bf16.mxu0 0
    %371 = vmatpush1.bf16.msra.mxu0 0
    %372 = vmatprep.subr.bf16.mxu0 0
    %373 = vmatpush1.bf16.msra.mxu0 0
    %374 = vmatprep.subr.bf16.mxu0 0
    %375 = vmatpush1.bf16.msra.mxu0 0
    %376 = vmatprep.subr.bf16.mxu0 0
    %377 = vmatpush1.bf16.msra.mxu0 0
    %378 = vmatprep.subr.bf16.mxu0 0
    %379 = vmatpush1.bf16.msra.mxu0 0
    %380 = vmatprep.subr.bf16.mxu0 0
    %381 = vmatpush1.bf16.msra.mxu0 0
    %382 = vmatprep.subr.bf16.mxu0 0
    %383 = vmatpush1.bf16.msra.mxu0 0
    %384 = vmatprep.subr.bf16.mxu0 0
    %385 = vmatpush1.bf16.msra.mxu0 0
    %386 = vmatprep.subr.bf16.mxu0 0
    %387 = vmatpush1.bf16.msra.mxu0 0
    %388 = vmatprep.mubr.bf16.mxu0 0
    %389 = vmatmul.mubr.bf16.gmra.mrb[0].mxu0 %v354
    %v390 = vpop.f32.mrb[0].mxu0
    %v391 = vadd.f32 0.0, %v390
    %v392 = vpop.f32.mrb[0].mxu0
    %v393 = vpop.f32.mrb[0].mxu0
    %v394 = vpop.f32.mrb[0].mxu0
    %395 = vdwg.mxu0
    %v397 = vrot.slane %v391, 5
    %v399 = vadd.f32 %v104, %v397
    %v400 = vxor.u32 %v399, 2147483648
    %v401 = vmul.f32 %v400, 1.442695
    %v402 = vpow.pop %v401
    %v403 = vadd.f32 %v402, 1.0
    %v404 = vrcp.pop %v403
    %v405 = vmul.f32 1.0, %v404
    %v406 = vtanh.pop %v399
    %v408 = vrot.slane %v341, 7
    %v410 = vmul.f32 %v405, %v408
    %412 = vrot.lane.b32.xlu0 %v406, 64
    %v413 = vpop.permute.xlu0 %412
    %v415 = vmul.f32 %v405, %v413
    %417 = vrot.lane.b32.xlu0 %v415, 32
    %v418 = vpop.permute.xlu0 %417
    %v420 = vadd.f32 %v410, %v418
    %v421 = vtanh.pop %v420
    %423 = vrot.lane.b32.xlu0 %v421, 64
    %v424 = vpop.permute.xlu0 %423
    %v426 = vmul.f32 %v405, %v424
    %v427 = vpack.c.bf16 %v426, %v426
    %v429 = vshrl.u32 %v427, 16
    %v431 = vrot.slane %v429, 1
    %432 = vrot.lane.b32.xlu0 %v431, 32
    %v433 = vpop.permute.xlu0 %432
    %v435 = vsel %vm121, %v433, 0
    %437 = vmatprep.subr.bf16.mxu0 0
    %438 = vmatpush1.bf16.msra.mxu0 %v117
    %439 = vmatprep.subr.bf16.mxu0 0
    %440 = vmatpush1.bf16.msra.mxu0 %v118
    %441 = vmatprep.subr.bf16.mxu0 0
    %442 = vmatpush1.bf16.msra.mxu0 0
    %443 = vmatprep.subr.bf16.mxu0 0
    %444 = vmatpush1.bf16.msra.mxu0 0
    %445 = vmatprep.subr.bf16.mxu0 0
    %446 = vmatpush1.bf16.msra.mxu0 0
    %447 = vmatprep.subr.bf16.mxu0 0
    %448 = vmatpush1.bf16.msra.mxu0 0
    %449 = vmatprep.subr.bf16.mxu0 0
    %450 = vmatpush1.bf16.msra.mxu0 0
    %451 = vmatprep.subr.bf16.mxu0 0
    %452 = vmatpush1.bf16.msra.mxu0 0
    %453 = vmatprep.subr.bf16.mxu0 0
    %454 = vmatpush1.bf16.msra.mxu0 0
    %455 = vmatprep.subr.bf16.mxu0 0
    %456 = vmatpush1.bf16.msra.mxu0 0
    %457 = vmatprep.subr.bf16.mxu0 0
    %458 = vmatpush1.bf16.msra.mxu0 0
    %459 = vmatprep.subr.bf16.mxu0 0
    %460 = vmatpush1.bf16.msra.mxu0 0
    %461 = vmatprep.subr.bf16.mxu0 0
    %462 = vmatpush1.bf16.msra.mxu0 0
    %463 = vmatprep.subr.bf16.mxu0 0
    %464 = vmatpush1.bf16.msra.mxu0 0
    %465 = vmatprep.subr.bf16.mxu0 0
    %466 = vmatpush1.bf16.msra.mxu0 0
    %467 = vmatprep.subr.bf16.mxu0 0
    %468 = vmatpush1.bf16.msra.mxu0 0
    %469 = vmatprep.mubr.bf16.mxu0 0
    %470 = vmatmul.mubr.bf16.gmra.mrb[0].mxu0 %v435
    %v471 = vpop.f32.mrb[0].mxu0
    %v472 = vadd.f32 0.0, %v471
    %v473 = vpop.f32.mrb[0].mxu0
    %v474 = vpop.f32.mrb[0].mxu0
    %v475 = vpop.f32.mrb[0].mxu0
    %476 = vdwg.mxu0
    %v478 = vrot.slane %v472, 4
    %v480 = vadd.f32 %v104, %v478
    %v481 = vxor.u32 %v480, 2147483648
    %v482 = vmul.f32 %v481, 1.442695
    %v483 = vpow.pop %v482
    %v484 = vadd.f32 %v483, 1.0
    %v485 = vrcp.pop %v484
    %v486 = vmul.f32 1.0, %v485
    %v487 = vtanh.pop %v480
    %v489 = vrot.slane %v420, 7
    %v491 = vmul.f32 %v486, %v489
    %493 = vrot.lane.b32.xlu0 %v487, 64
    %v494 = vpop.permute.xlu0 %493
    %v496 = vmul.f32 %v486, %v494
    %498 = vrot.lane.b32.xlu0 %v496, 32
    %v499 = vpop.permute.xlu0 %498
    %v501 = vadd.f32 %v491, %v499
    %v502 = vtanh.pop %v501
    %504 = vrot.lane.b32.xlu0 %v502, 64
    %v505 = vpop.permute.xlu0 %504
    %v507 = vmul.f32 %v486, %v505
    %v508 = vpack.c.bf16 %v507, %v507
    %v510 = vrot.slane %v508, 2
    %511 = vrot.lane.b32.xlu0 %v510, 32
    %v512 = vpop.permute.xlu0 %511
    %v514 = vsel %vm121, %v512, 0
    %516 = vmatprep.subr.bf16.mxu0 0
    %517 = vmatpush1.bf16.msra.mxu0 %v117
    %518 = vmatprep.subr.bf16.mxu0 0
    %519 = vmatpush1.bf16.msra.mxu0 %v118
    %520 = vmatprep.subr.bf16.mxu0 0
    %521 = vmatpush1.bf16.msra.mxu0 0
    %522 = vmatprep.subr.bf16.mxu0 0
    %523 = vmatpush1.bf16.msra.mxu0 0
    %524 = vmatprep.subr.bf16.mxu0 0
    %525 = vmatpush1.bf16.msra.mxu0 0
    %526 = vmatprep.subr.bf16.mxu0 0
    %527 = vmatpush1.bf16.msra.mxu0 0
    %528 = vmatprep.subr.bf16.mxu0 0
    %529 = vmatpush1.bf16.msra.mxu0 0
    %530 = vmatprep.subr.bf16.mxu0 0
    %531 = vmatpush1.bf16.msra.mxu0 0
    %532 = vmatprep.subr.bf16.mxu0 0
    %533 = vmatpush1.bf16.msra.mxu0 0
    %534 = vmatprep.subr.bf16.mxu0 0
    %535 = vmatpush1.bf16.msra.mxu0 0
    %536 = vmatprep.subr.bf16.mxu0 0
    %537 = vmatpush1.bf16.msra.mxu0 0
    %538 = vmatprep.subr.bf16.mxu0 0
    %539 = vmatpush1.bf16.msra.mxu0 0
    %540 = vmatprep.subr.bf16.mxu0 0
    %541 = vmatpush1.bf16.msra.mxu0 0
    %542 = vmatprep.subr.bf16.mxu0 0
    %543 = vmatpush1.bf16.msra.mxu0 0
    %544 = vmatprep.subr.bf16.mxu0 0
    %545 = vmatpush1.bf16.msra.mxu0 0
    %546 = vmatprep.subr.bf16.mxu0 0
    %547 = vmatpush1.bf16.msra.mxu0 0
    %548 = vmatprep.mubr.bf16.mxu0 0
    %549 = vmatmul.mubr.bf16.gmra.mrb[0].mxu0 %v514
    %v550 = vpop.f32.mrb[0].mxu0
    %v551 = vadd.f32 0.0, %v550
    %v552 = vpop.f32.mrb[0].mxu0
    %v553 = vpop.f32.mrb[0].mxu0
    %v554 = vpop.f32.mrb[0].mxu0
    %555 = vdwg.mxu0
    %v557 = vrot.slane %v551, 3
    %v559 = vadd.f32 %v104, %v557
    %v560 = vxor.u32 %v559, 2147483648
    %v561 = vmul.f32 %v560, 1.442695
    %v562 = vpow.pop %v561
    %v563 = vadd.f32 %v562, 1.0
    %v564 = vrcp.pop %v563
    %v565 = vmul.f32 1.0, %v564
    %v566 = vtanh.pop %v559
    %v568 = vrot.slane %v501, 7
    %v570 = vmul.f32 %v565, %v568
    %572 = vrot.lane.b32.xlu0 %v566, 64
    %v573 = vpop.permute.xlu0 %572
    %v575 = vmul.f32 %v565, %v573
    %577 = vrot.lane.b32.xlu0 %v575, 32
    %v578 = vpop.permute.xlu0 %577
    %v580 = vadd.f32 %v570, %v578
    %v581 = vtanh.pop %v580
    %583 = vrot.lane.b32.xlu0 %v581, 64
    %v584 = vpop.permute.xlu0 %583
    %v586 = vmul.f32 %v565, %v584
    %v587 = vpack.c.bf16 %v586, %v586
    %v589 = vshrl.u32 %v587, 16
    %v591 = vrot.slane %v589, 2
    %592 = vrot.lane.b32.xlu0 %v591, 32
    %v593 = vpop.permute.xlu0 %592
    %v595 = vsel %vm121, %v593, 0
    %597 = vmatprep.subr.bf16.mxu0 0
    %598 = vmatpush1.bf16.msra.mxu0 %v117
    %599 = vmatprep.subr.bf16.mxu0 0
    %600 = vmatpush1.bf16.msra.mxu0 %v118
    %601 = vmatprep.subr.bf16.mxu0 0
    %602 = vmatpush1.bf16.msra.mxu0 0
    %603 = vmatprep.subr.bf16.mxu0 0
    %604 = vmatpush1.bf16.msra.mxu0 0
    %605 = vmatprep.subr.bf16.mxu0 0
    %606 = vmatpush1.bf16.msra.mxu0 0
    %607 = vmatprep.subr.bf16.mxu0 0
    %608 = vmatpush1.bf16.msra.mxu0 0
    %609 = vmatprep.subr.bf16.mxu0 0
    %610 = vmatpush1.bf16.msra.mxu0 0
    %611 = vmatprep.subr.bf16.mxu0 0
    %612 = vmatpush1.bf16.msra.mxu0 0
    %613 = vmatprep.subr.bf16.mxu0 0
    %614 = vmatpush1.bf16.msra.mxu0 0
    %615 = vmatprep.subr.bf16.mxu0 0
    %616 = vmatpush1.bf16.msra.mxu0 0
    %617 = vmatprep.subr.bf16.mxu0 0
    %618 = vmatpush1.bf16.msra.mxu0 0
    %619 = vmatprep.subr.bf16.mxu0 0
    %620 = vmatpush1.bf16.msra.mxu0 0
    %621 = vmatprep.subr.bf16.mxu0 0
    %622 = vmatpush1.bf16.msra.mxu0 0
    %623 = vmatprep.subr.bf16.mxu0 0
    %624 = vmatpush1.bf16.msra.mxu0 0
    %625 = vmatprep.subr.bf16.mxu0 0
    %626 = vmatpush1.bf16.msra.mxu0 0
    %627 = vmatprep.subr.bf16.mxu0 0
    %628 = vmatpush1.bf16.msra.mxu0 0
    %629 = vmatprep.mubr.bf16.mxu0 0
    %630 = vmatmul.mubr.bf16.gmra.mrb[0].mxu0 %v595
    %v631 = vpop.f32.mrb[0].mxu0
    %v632 = vadd.f32 0.0, %v631
    %v633 = vpop.f32.mrb[0].mxu0
    %v634 = vpop.f32.mrb[0].mxu0
    %v635 = vpop.f32.mrb[0].mxu0
    %636 = vdwg.mxu0
    %v638 = vrot.slane %v632, 2
    %v640 = vadd.f32 %v104, %v638
    %v641 = vxor.u32 %v640, 2147483648
    %v642 = vmul.f32 %v641, 1.442695
    %v643 = vpow.pop %v642
    %v644 = vadd.f32 %v643, 1.0
    %v645 = vrcp.pop %v644
    %v646 = vmul.f32 1.0, %v645
    %v647 = vtanh.pop %v640
    %v649 = vrot.slane %v580, 7
    %v651 = vmul.f32 %v646, %v649
    %653 = vrot.lane.b32.xlu0 %v647, 64
    %v654 = vpop.permute.xlu0 %653
    %v656 = vmul.f32 %v646, %v654
    %658 = vrot.lane.b32.xlu0 %v656, 32
    %v659 = vpop.permute.xlu0 %658
    %v661 = vadd.f32 %v651, %v659
    %v662 = vtanh.pop %v661
    %664 = vrot.lane.b32.xlu0 %v662, 64
    %v665 = vpop.permute.xlu0 %664
    %v667 = vmul.f32 %v646, %v665
    %v668 = vpack.c.bf16 %v667, %v667
    %v670 = vrot.slane %v668, 3
    %671 = vrot.lane.b32.xlu0 %v670, 32
    %v672 = vpop.permute.xlu0 %671
    %v674 = vsel %vm121, %v672, 0
    %676 = vmatprep.subr.bf16.mxu0 0
    %677 = vmatpush1.bf16.msra.mxu0 %v117
    %678 = vmatprep.subr.bf16.mxu0 0
    %679 = vmatpush1.bf16.msra.mxu0 %v118
    %680 = vmatprep.subr.bf16.mxu0 0
    %681 = vmatpush1.bf16.msra.mxu0 0
    %682 = vmatprep.subr.bf16.mxu0 0
    %683 = vmatpush1.bf16.msra.mxu0 0
    %684 = vmatprep.subr.bf16.mxu0 0
    %685 = vmatpush1.bf16.msra.mxu0 0
    %686 = vmatprep.subr.bf16.mxu0 0
    %687 = vmatpush1.bf16.msra.mxu0 0
    %688 = vmatprep.subr.bf16.mxu0 0
    %689 = vmatpush1.bf16.msra.mxu0 0
    %690 = vmatprep.subr.bf16.mxu0 0
    %691 = vmatpush1.bf16.msra.mxu0 0
    %692 = vmatprep.subr.bf16.mxu0 0
    %693 = vmatpush1.bf16.msra.mxu0 0
    %694 = vmatprep.subr.bf16.mxu0 0
    %695 = vmatpush1.bf16.msra.mxu0 0
    %696 = vmatprep.subr.bf16.mxu0 0
    %697 = vmatpush1.bf16.msra.mxu0 0
    %698 = vmatprep.subr.bf16.mxu0 0
    %699 = vmatpush1.bf16.msra.mxu0 0
    %700 = vmatprep.subr.bf16.mxu0 0
    %701 = vmatpush1.bf16.msra.mxu0 0
    %702 = vmatprep.subr.bf16.mxu0 0
    %703 = vmatpush1.bf16.msra.mxu0 0
    %704 = vmatprep.subr.bf16.mxu0 0
    %705 = vmatpush1.bf16.msra.mxu0 0
    %706 = vmatprep.subr.bf16.mxu0 0
    %707 = vmatpush1.bf16.msra.mxu0 0
    %708 = vmatprep.mubr.bf16.mxu0 0
    %709 = vmatmul.mubr.bf16.gmra.mrb[0].mxu0 %v674
    %v710 = vpop.f32.mrb[0].mxu0
    %v711 = vadd.f32 0.0, %v710
    %v712 = vpop.f32.mrb[0].mxu0
    %v713 = vpop.f32.mrb[0].mxu0
    %v714 = vpop.f32.mrb[0].mxu0
    %715 = vdwg.mxu0
    %v717 = vrot.slane %v711, 1
    %v719 = vadd.f32 %v104, %v717
    %v720 = vxor.u32 %v719, 2147483648
    %v721 = vmul.f32 %v720, 1.442695
    %v722 = vpow.pop %v721
    %v723 = vadd.f32 %v722, 1.0
    %v724 = vrcp.pop %v723
    %v725 = vmul.f32 1.0, %v724
    %v726 = vtanh.pop %v719
    %v728 = vrot.slane %v661, 7
    %v730 = vmul.f32 %v725, %v728
    %732 = vrot.lane.b32.xlu0 %v726, 64
    %v733 = vpop.permute.xlu0 %732
    %v735 = vmul.f32 %v725, %v733
    %737 = vrot.lane.b32.xlu0 %v735, 32
    %v738 = vpop.permute.xlu0 %737
    %v740 = vadd.f32 %v730, %v738
    %v741 = vtanh.pop %v740
    %743 = vrot.lane.b32.xlu0 %v741, 64
    %v744 = vpop.permute.xlu0 %743
    %v746 = vmul.f32 %v725, %v744
    %vm747 = vcmask 1040384
    %v748 = vsel %vm747, %v189, %v267
    %vm749 = vcmask 1041408
    %v750 = vsel %vm749, %v748, %v347
    %vm751 = vcmask 1042432
    %v752 = vsel %vm751, %v750, %v426
    %vm753 = vcmask 1043456
    %v754 = vsel %vm753, %v752, %v507
    %vm755 = vcmask 1044480
    %v756 = vsel %vm755, %v754, %v586
    %vm757 = vcmask 1045504
    %v758 = vsel %vm757, %v756, %v667
    %vm759 = vcmask 1046528
    %v760 = vsel %vm759, %v758, %v746
    %v761 = vpack.c.bf16 %v760, %v760
    %v763 = vlaneseq
    %v764 = vshrl.u32 %v763, 7
    %v765 = vsub.s32 0, %v764
    %v766 = vrot.slane %v50, %v765
    %769 = vrot.lane.b32.xlu0 %v761, 32
    %v770 = vpop.permute.xlu0 %769
    %v775 = vunpack.c.l.b16 %v45
    %v776 = vunpack.c.l.b16 %v46
    %v777 = vunpack.c.l.b16 %v47
    %v778 = vunpack.c.l.b16 %v48
    %v779 = vpack.c.b16 %v776, %v775
    %v780 = vpack.c.b16 %v778, %v777
    %v784 = vsel %vm121, %v770, 0
    %786 = vmatprep.subr.bf16.mxu0 0
    %787 = vmatpush1.bf16.msra.mxu0 %v779
    %788 = vmatprep.subr.bf16.mxu0 0
    %789 = vmatpush1.bf16.msra.mxu0 %v780
    %790 = vmatprep.subr.bf16.mxu0 0
    %791 = vmatpush1.bf16.msra.mxu0 0
    %792 = vmatprep.subr.bf16.mxu0 0
    %793 = vmatpush1.bf16.msra.mxu0 0
    %794 = vmatprep.subr.bf16.mxu0 0
    %795 = vmatpush1.bf16.msra.mxu0 0
    %796 = vmatprep.subr.bf16.mxu0 0
    %797 = vmatpush1.bf16.msra.mxu0 0
    %798 = vmatprep.subr.bf16.mxu0 0
    %799 = vmatpush1.bf16.msra.mxu0 0
    %800 = vmatprep.subr.bf16.mxu0 0
    %801 = vmatpush1.bf16.msra.mxu0 0
    %802 = vmatprep.subr.bf16.mxu0 0
    %803 = vmatpush1.bf16.msra.mxu0 0
    %804 = vmatprep.subr.bf16.mxu0 0
    %805 = vmatpush1.bf16.msra.mxu0 0
    %806 = vmatprep.subr.bf16.mxu0 0
    %807 = vmatpush1.bf16.msra.mxu0 0
    %808 = vmatprep.subr.bf16.mxu0 0
    %809 = vmatpush1.bf16.msra.mxu0 0
    %810 = vmatprep.subr.bf16.mxu0 0
    %811 = vmatpush1.bf16.msra.mxu0 0
    %812 = vmatprep.subr.bf16.mxu0 0
    %813 = vmatpush1.bf16.msra.mxu0 0
    %814 = vmatprep.subr.bf16.mxu0 0
    %815 = vmatpush1.bf16.msra.mxu0 0
    %816 = vmatprep.subr.bf16.mxu0 0
    %817 = vmatpush1.bf16.msra.mxu0 0
    %818 = vmatprep.mubr.bf16.mxu0 0
    %819 = vmatmul.mubr.bf16.gmra.mrb[0].mxu0 %v784
    %v820 = vpop.f32.mrb[0].mxu0
    %v821 = vadd.f32 %v766, %v820
    %v822 = vpop.f32.mrb[0].mxu0
    %v823 = vpop.f32.mrb[0].mxu0
    %v824 = vpop.f32.mrb[0].mxu0
    %825 = vdwg.mxu0
    %vm826 = vcmask 64512
    %v827 = vsel %vm826, %v821, -inf
    %828 = vmax.xlane.f32.xlu0 %v827
    %v829 = vpop.xlane.xlu0 %828
    %v830 = vsub.f32 %v821, %v829
    %v831 = vmul.f32 %v830, 1.442695
    %v832 = vpow.pop %v831
    %v833 = vsel %vm826, %v832, 0.0
    %834 = vadd.xlane.f32.xlu0 %v833
    %v835 = vpop.xlane.xlu0 %834
    %v836 = vlog2.pop %v835
    %v837 = vmul.f32 %v836, 0.6931472
    %v838 = vsub.f32 %v830, %v837
    %839 = vst.msk [vmem:[#allocation5] sm:$0xff] %vm826, %v838
    // Predicated region
    $region30: #{tpu_custom_call.1} parent=1 // pred_check
      _
    $region31: #{tpu_custom_call.1} parent=1 // pred_check_branch
      %841 = sbr.rel (0) target = $region33
    $region32: #{tpu_custom_call.1} parent=1 // pred_region
      %s843 = ssub.s32 128, 128
      %844 = vsyncadd [#allocation4], %s843
      %s846 = sshll.u32 [#allocation5], 4
      %s847 = int_to_ptr.vmem [resolvable:$true] %s846
      %849 = dma.vmem_to_hbm [thread:$0]  %s847, 128, %s6, [#allocation4]
    $region33: #{tpu_custom_call.1} parent=1 // pred_fallthru
      _
    // Predicated region
    $region34: #{tpu_custom_call.1} parent=1 // pred_check
      _
    $region35: #{tpu_custom_call.1} parent=1 // pred_check_branch
      %851 = sbr.rel (0) target = $region37
    $region36: #{tpu_custom_call.1} parent=1 // pred_region
      %852 = dma.done [#allocation4], 128
    $region37: #{tpu_custom_call.1} parent=1 // pred_fallthru
      _
    %853 = vsyncpa [#allocation3], 1
    %854 = vsyncpa [#allocation4], 1

</llo_original>
